<compile_context>
chip_gen: v7x
topology: tpu7x:2x2x1
jax: 0.10.0
libtpu: 0.0.40
codegen_flags: <defaults>
</compile_context>

<pallas_src>
import functools
import math

import jax
import jax.numpy as jnp
from jax import lax
from jax.experimental import pallas as pl
from jax.experimental.pallas import tpu as pltpu

EPS = 1e-5  # PyTorch LayerNorm default eps


def _layernorm(x, gamma, beta):
    # PyTorch LayerNorm: biased variance over last dim (f32 math).
    mu = jnp.mean(x, axis=-1, keepdims=True)
    var = jnp.mean((x - mu) ** 2, axis=-1, keepdims=True)
    return (x - mu) * lax.rsqrt(var + EPS) * gamma + beta


# ----------------------------------------------------------------------------
# Kernel: grid = (B // Bt, n_layers), batch axis "parallel", layer axis
# "arbitrary". The (Bt, L, d_m) activation lives in the resident output block
# across the layer axis; at l == 0 it is initialized with the fused 1x1 convs
# + input LayerNorm, and every l applies one self-attention block in place.
# ----------------------------------------------------------------------------
def encoder_kernel(x_ref, w12_ref, c0_ref, wqkv_ref, bqkv_ref, wo_ref, vec_ref,
                   o_ref, *, d_k, d_v):
    l = pl.program_id(1)
    Bt, L, _ = x_ref.shape
    d_m = o_ref.shape[-1]
    M = Bt * L

    @pl.when(l == 0)
    def _():
        # conv1 + conv2 (both 1x1, no nonlinearity between) pre-fused into w12.
        h = lax.dot_general(x_ref[...], w12_ref[...],
                            dimension_numbers=(((2,), (0,)), ((), ())),
                            preferred_element_type=jnp.float32)      # (Bt, L, d_m)
        h = h + c0_ref[0:1, :]
        # input LayerNorm; dropout = identity (eval).
        o_ref[...] = _layernorm(h, c0_ref[1:2, :], c0_ref[2:3, :])

    out = o_ref[...]                                                  # (Bt, L, d_m) f32
    out_bf = out.reshape(M, d_m).astype(jnp.bfloat16)

    # Fused Q|K|V projection: one lane-dense (d_m, 128-padded) matmul.
    n_pad = wqkv_ref.shape[-1]
    qkv = jnp.dot(out_bf, wqkv_ref[0], preferred_element_type=jnp.float32)
    qkv = (qkv + bqkv_ref[0]).reshape(Bt, L, n_pad)
    q = qkv[..., :d_k]                   # 1/sqrt(d_k) pre-folded into wq/bq
    k = qkv[..., d_k:2 * d_k]
    v = qkv[..., 2 * d_k:2 * d_k + d_v]

    # Scores: contract the last dims of q and k (no explicit transpose).
    s = lax.dot_general(q.astype(jnp.bfloat16), k.astype(jnp.bfloat16),
                        dimension_numbers=(((2,), (2,)), ((0,), (0,))),
                        preferred_element_type=jnp.float32)           # (Bt, L, L)
    m = jnp.max(s, axis=-1, keepdims=True)
    p = jnp.exp(s - m)
    p = p / jnp.sum(p, axis=-1, keepdims=True)                        # exact f32 softmax

    ctx = lax.dot_general(p.astype(jnp.bfloat16), v.astype(jnp.bfloat16),
                          dimension_numbers=(((2,), (1,)), ((0,), (0,))),
                          preferred_element_type=jnp.float32)         # (Bt, L, d_v)

    attn = jnp.dot(ctx.reshape(M, d_v).astype(jnp.bfloat16), wo_ref[0],
                   preferred_element_type=jnp.float32)                # (M, d_m)
    attn = (attn + vec_ref[0, 0:1, :]).reshape(Bt, L, d_m)

    # Residual + LayerNorm, carried in the resident output block.
    o_ref[...] = _layernorm(attn + out, vec_ref[0, 1:2, :], vec_ref[0, 2:3, :])
    # TODO(synk): PositionwiseFeedForward output is discarded by the PyTorch
    # module (EncoderLayer returns enc_slf_attn), so the FFN is omitted.


# ----------------------------------------------------------------------------
# Weight preprocessing shared by the kernel wrapper and the JAX reference.
# ----------------------------------------------------------------------------
def _prepare(params, d_k, d_v):
    # Algebraic fusion of the two 1x1 convs (no nonlinearity between them).
    w12 = (params["w1"] @ params["w2"]).astype(jnp.bfloat16)          # (d_in, d_m)
    b12 = params["b1"] @ params["w2"] + params["b2"]                  # (1, d_m) f32
    c0 = jnp.concatenate([b12, params["ln_g"], params["ln_b"]], axis=0)  # (3, d_m)

    scale = 1.0 / math.sqrt(d_k)
    n_qkv = 2 * d_k + d_v
    n_pad = -(-n_qkv // 128) * 128                                    # pad to lane-dense
    wqkv_l, bqkv_l, wo_l, vec_l = [], [], [], []
    for lyr in params["layers"]:
        wqkv = jnp.concatenate([lyr["wq"] * scale, lyr["wk"], lyr["wv"]], axis=1)
        bqkv = jnp.concatenate([lyr["bq"] * scale, lyr["bk"], lyr["bv"]], axis=1)
        if n_pad > n_qkv:
            wqkv = jnp.pad(wqkv, ((0, 0), (0, n_pad - n_qkv)))
            bqkv = jnp.pad(bqkv, ((0, 0), (0, n_pad - n_qkv)))
        wqkv_l.append(wqkv.astype(jnp.bfloat16))
        bqkv_l.append(bqkv)
        wo_l.append(lyr["wo"].astype(jnp.bfloat16))
        vec_l.append(jnp.concatenate([lyr["bo"], lyr["g"], lyr["b"]], axis=0))
    return dict(
        w12=w12, c0=c0,
        wqkv=jnp.stack(wqkv_l), bqkv=jnp.stack(bqkv_l),
        wo=jnp.stack(wo_l), vecs=jnp.stack(vec_l),
        d_k=d_k, d_v=d_v)


def _pick_bt(B, L, target_rows=256):
    # Largest batch-tile (divisor of B) with Bt*L <= target_rows; keep >= 2
    # steps on the parallel grid axis when B >= 2 (both v7x TCs get work).
    best = 1
    for bt in range(1, B + 1):
        if B % bt or bt * L > target_rows:
            continue
        if B >= 2 and B // bt < 2:
            continue
        best = bt
    return best


def encoder_forward(params, x_ncl, d_k, d_v, *, bt=None):
    prep = _prepare(params, d_k, d_v)
    # x_ncl: (B, d_input, L) (PyTorch Conv1d layout) -> channels-last, bf16.
    x = jnp.transpose(x_ncl, (0, 2, 1)).astype(jnp.bfloat16)          # (B, L, d_in)
    B, L, d_in = x.shape
    d_m = prep["w12"].shape[1]
    n_layers = prep["wqkv"].shape[0]
    n_pad = prep["wqkv"].shape[-1]

    if bt is None:
        bt = _pick_bt(B, L)
    assert B % bt == 0

    kernel = functools.partial(encoder_kernel, d_k=d_k, d_v=d_v)
    return pl.pallas_call(
        kernel,
        out_shape=jax.ShapeDtypeStruct((B, L, d_m), jnp.float32),
        grid=(B // bt, n_layers),
        in_specs=[
            pl.BlockSpec((bt, L, d_in), lambda b, l: (b, 0, 0)),       # activations
            pl.BlockSpec(prep["w12"].shape, lambda b, l: (0, 0)),      # fused conv W
            pl.BlockSpec(prep["c0"].shape, lambda b, l: (0, 0)),       # b12|ln_g|ln_b
            pl.BlockSpec((1, d_m, n_pad), lambda b, l: (l, 0, 0)),     # fused Wqkv
            pl.BlockSpec((1, 1, n_pad), lambda b, l: (l, 0, 0)),       # fused bqkv
            pl.BlockSpec((1, d_v, d_m), lambda b, l: (l, 0, 0)),       # Wo
            pl.BlockSpec((1, 3, d_m), lambda b, l: (l, 0, 0)),         # bo|gamma|beta
        ],
        out_specs=pl.BlockSpec((bt, L, d_m), lambda b, l: (b, 0, 0)),
        compiler_params=pltpu.CompilerParams(
            dimension_semantics=("parallel", "arbitrary")),
    )(x, prep["w12"], prep["c0"], prep["wqkv"], prep["bqkv"],
      prep["wo"], prep["vecs"])


# ----------------------------------------------------------------------------
# Parameters
# ----------------------------------------------------------------------------
def init_params(key, d_input, n_layers, d_k, d_v, d_m):
    ks = iter(jax.random.split(key, 4 + 8 * n_layers))
    nrm = lambda k, shp, s=0.1: (s * jax.random.normal(k, shp)).astype(jnp.float32)
    p = {
        "w1": nrm(next(ks), (d_input, 64)),          # Conv1d(d_input,64,1) weight (in,out)
        "b1": nrm(next(ks), (1, 64)),
        "w2": nrm(next(ks), (64, d_m)),              # Conv1d(64,128,1) weight (in,out)
        "b2": nrm(next(ks), (1, d_m)),
        "ln_g": jnp.ones((1, d_m), jnp.float32),
        "ln_b": jnp.zeros((1, d_m), jnp.float32),
        "layers": [],
    }
    for _ in range(n_layers):
        lyr = {
            "wq": nrm(next(ks), (d_m, d_k)), "bq": nrm(next(ks), (1, d_k)),
            "wk": nrm(next(ks), (d_m, d_k)), "bk": nrm(next(ks), (1, d_k)),
            "wv": nrm(next(ks), (d_m, d_v)), "bv": nrm(next(ks), (1, d_v)),
            "wo": nrm(next(ks), (d_v, d_m)), "bo": nrm(next(ks), (1, d_m)),
            "g": jnp.ones((1, d_m), jnp.float32),
            "b": jnp.zeros((1, d_m), jnp.float32),
        }
        p["layers"].append(lyr)
    return p


# Pure-JAX reference mirroring the kernel numerics (same fused/folded weights,
# bf16 matmul operands with f32 accumulation, f32 softmax/LayerNorm).
def encoder_ref(prep, x_ncl):
    d_k, d_v = prep["d_k"], prep["d_v"]
    x = jnp.transpose(x_ncl, (0, 2, 1)).astype(jnp.bfloat16)
    h = jnp.einsum("bld,dm->blm", x, prep["w12"],
                   preferred_element_type=jnp.float32) + prep["c0"][0:1]
    out = _layernorm(h, prep["c0"][1:2], prep["c0"][2:3])
    for l in range(prep["wqkv"].shape[0]):
        qkv = jnp.einsum("blm,mn->bln", out.astype(jnp.bfloat16), prep["wqkv"][l],
                         preferred_element_type=jnp.float32) + prep["bqkv"][l]
        q, k, v = qkv[..., :d_k], qkv[..., d_k:2 * d_k], qkv[..., 2 * d_k:2 * d_k + d_v]
        s = jnp.einsum("bqd,bkd->bqk", q.astype(jnp.bfloat16), k.astype(jnp.bfloat16),
                       preferred_element_type=jnp.float32)
        p = jnp.exp(s - jnp.max(s, axis=-1, keepdims=True))
        p = p / jnp.sum(p, axis=-1, keepdims=True)
        ctx = jnp.einsum("bqk,bkd->bqd", p.astype(jnp.bfloat16), v.astype(jnp.bfloat16),
                         preferred_element_type=jnp.float32)
        o = jnp.einsum("bld,dm->blm", ctx.astype(jnp.bfloat16), prep["wo"][l],
                       preferred_element_type=jnp.float32) + prep["vecs"][l, 0:1]
        out = _layernorm(o + out, prep["vecs"][l, 1:2], prep["vecs"][l, 2:3])
    return out


if __name__ == "__main__":
    # Small, forward-consistent shapes: d_m must equal 128 (output of conv2).
    B, L = 4, 16
    d_input, n_layers, d_k, d_v, d_m, d_ff = 4, 2, 32, 32, 128, 256

    key = jax.random.PRNGKey(0)
    kx, kp = jax.random.split(key)
    x = jax.random.normal(kx, (B, d_input, L), dtype=jnp.float32)  # (B, C_in, L)
    params = init_params(kp, d_input, n_layers, d_k, d_v, d_m)

    out = jax.block_until_ready(encoder_forward(params, x, d_k, d_v))
    ref = encoder_ref(_prepare(params, d_k, d_v), x)

    assert out.shape == (B, L, d_m)
    assert jnp.allclose(out, ref, rtol=2e-2, atol=2e-2), "mismatch vs reference"

    print("KERNEL_OK")
</pallas_src>

<mosaic_0001>
module attributes {stable_mosaic.version = 11 : i64} {
  func.func @encoder_kernel(%arg0: i32, %arg1: i32, %arg2: memref<2x16x4xbf16, #tpu.memory_space<vmem>>, %arg3: memref<4x128xbf16, #tpu.memory_space<vmem>>, %arg4: memref<3x128xf32, #tpu.memory_space<vmem>>, %arg5: memref<1x128x128xbf16, #tpu.memory_space<vmem>>, %arg6: memref<1x1x128xf32, #tpu.memory_space<vmem>>, %arg7: memref<1x32x128xbf16, #tpu.memory_space<vmem>>, %arg8: memref<1x3x128xf32, #tpu.memory_space<vmem>>, %arg9: memref<2x16x128xf32, #tpu.memory_space<vmem>>) attributes {dimension_semantics = [#tpu.dimension_semantics<parallel>, #tpu.dimension_semantics<arbitrary>], iteration_bounds = array<i64: 2, 2>, scalar_prefetch = 0 : i64, scratch_operands = 0 : i64, tpu.core_type = #tpu.core_type<tc>, window_params = [{transform_indices = @transform_0, window_bounds = array<i64: 2, 16, 4>}, {pipeline_mode = #tpu.pipeline_mode<synchronous>, transform_indices = @transform_1, window_bounds = array<i64: 4, 128>}, {pipeline_mode = #tpu.pipeline_mode<synchronous>, transform_indices = @transform_2, window_bounds = array<i64: 3, 128>}, {transform_indices = @transform_3, window_bounds = array<i64: 1, 128, 128>}, {transform_indices = @transform_4, window_bounds = array<i64: 1, 1, 128>}, {transform_indices = @transform_5, window_bounds = array<i64: 1, 32, 128>}, {transform_indices = @transform_6, window_bounds = array<i64: 1, 3, 128>}, {transform_indices = @transform_7, window_bounds = array<i64: 2, 16, 128>}]} {
    %c0_i32 = arith.constant 0 : i32
    %0 = arith.cmpi eq, %arg1, %c0_i32 : i32
    %1 = arith.extui %0 : i1 to i32
    %c0_i32_0 = arith.constant 0 : i32
    %2 = arith.cmpi ne, %1, %c0_i32_0 : i32
    scf.if %2 {
      %c0_32 = arith.constant 0 : index
      %c0_33 = arith.constant 0 : index
      %c0_34 = arith.constant 0 : index
      %72 = vector.load %arg2[%c0_32, %c0_33, %c0_34] : memref<2x16x4xbf16, #tpu.memory_space<vmem>>, vector<2x16x4xbf16>
      %c0_35 = arith.constant 0 : index
      %c0_36 = arith.constant 0 : index
      %73 = vector.load %arg3[%c0_35, %c0_36] : memref<4x128xbf16, #tpu.memory_space<vmem>>, vector<4x128xbf16>
      %cst_37 = arith.constant dense<0.000000e+00> : vector<2x16x128xf32>
      %74 = tpu.matmul %72, %73, %cst_37 {dimension_numbers = #tpu.dot_dimension_numbers<[2], [0], [0, 1], [1], [0, 0, 0, 1, 1, 1], [], []>} : vector<2x16x4xbf16>, vector<4x128xbf16>, vector<2x16x128xf32> -> vector<2x16x128xf32>
      %c0_38 = arith.constant 0 : index
      %c0_39 = arith.constant 0 : index
      %75 = vector.load %arg4[%c0_38, %c0_39] : memref<3x128xf32, #tpu.memory_space<vmem>>, vector<1x128xf32>
      %76 = vector.shape_cast %75 : vector<1x128xf32> to vector<1x1x128xf32>
      %77 = vector.broadcast %76 : vector<1x1x128xf32> to vector<2x16x128xf32>
      %78 = arith.addf %74, %77 : vector<2x16x128xf32>
      %c1_40 = arith.constant 1 : index
      %c0_41 = arith.constant 0 : index
      %79 = vector.load %arg4[%c1_40, %c0_41] : memref<3x128xf32, #tpu.memory_space<vmem>>, vector<1x128xf32>
      %c2_42 = arith.constant 2 : index
      %c0_43 = arith.constant 0 : index
      %80 = vector.load %arg4[%c2_42, %c0_43] : memref<3x128xf32, #tpu.memory_space<vmem>>, vector<1x128xf32>
      %cst_44 = arith.constant dense<0.000000e+00> : vector<2x16xf32>
      %81 = vector.multi_reduction <add>, %78, %cst_44 [2] : vector<2x16x128xf32> to vector<2x16xf32>
      %82 = vector.shape_cast %81 : vector<2x16xf32> to vector<2x16x1xf32>
      %cst_45 = arith.constant 1.280000e+02 : f32
      %83 = vector.broadcast %cst_45 : f32 to vector<2x16x1xf32>
      %84 = arith.divf %82, %83 : vector<2x16x1xf32>
      %85 = vector.broadcast %84 : vector<2x16x1xf32> to vector<2x16x128xf32>
      %86 = arith.subf %78, %85 : vector<2x16x128xf32>
      %87 = arith.mulf %86, %86 : vector<2x16x128xf32>
      %cst_46 = arith.constant dense<0.000000e+00> : vector<2x16xf32>
      %88 = vector.multi_reduction <add>, %87, %cst_46 [2] : vector<2x16x128xf32> to vector<2x16xf32>
      %89 = vector.shape_cast %88 : vector<2x16xf32> to vector<2x16x1xf32>
      %cst_47 = arith.constant 1.280000e+02 : f32
      %90 = vector.broadcast %cst_47 : f32 to vector<2x16x1xf32>
      %91 = arith.divf %89, %90 : vector<2x16x1xf32>
      %92 = vector.broadcast %84 : vector<2x16x1xf32> to vector<2x16x128xf32>
      %93 = arith.subf %78, %92 : vector<2x16x128xf32>
      %cst_48 = arith.constant 9.99999974E-6 : f32
      %94 = vector.broadcast %cst_48 : f32 to vector<2x16x1xf32>
      %95 = arith.addf %91, %94 : vector<2x16x1xf32>
      %96 = math.rsqrt %95 : vector<2x16x1xf32>
      %97 = vector.broadcast %96 : vector<2x16x1xf32> to vector<2x16x128xf32>
      %98 = arith.mulf %93, %97 : vector<2x16x128xf32>
      %99 = vector.shape_cast %79 : vector<1x128xf32> to vector<1x1x128xf32>
      %100 = vector.broadcast %99 : vector<1x1x128xf32> to vector<2x16x128xf32>
      %101 = arith.mulf %98, %100 : vector<2x16x128xf32>
      %102 = vector.shape_cast %80 : vector<1x128xf32> to vector<1x1x128xf32>
      %103 = vector.broadcast %102 : vector<1x1x128xf32> to vector<2x16x128xf32>
      %104 = arith.addf %101, %103 : vector<2x16x128xf32>
      %c0_49 = arith.constant 0 : index
      %c0_50 = arith.constant 0 : index
      %c0_51 = arith.constant 0 : index
      %105 = vector.load %arg9[%c0_49, %c0_50, %c0_51] : memref<2x16x128xf32, #tpu.memory_space<vmem>>, vector<2x16x128xf32>
      tpu.vector_store %arg9[%c0_49, %c0_50, %c0_51], %104 {strides = array<i32>} : memref<2x16x128xf32, #tpu.memory_space<vmem>>, vector<2x16x128xf32>,
    } else {
    }
    %c0 = arith.constant 0 : index
    %c0_1 = arith.constant 0 : index
    %c0_2 = arith.constant 0 : index
    %3 = vector.load %arg9[%c0, %c0_1, %c0_2] : memref<2x16x128xf32, #tpu.memory_space<vmem>>, vector<2x16x128xf32>
    %4 = vector.shape_cast %3 : vector<2x16x128xf32> to vector<32x128xf32>
    %5 = arith.truncf %4 : vector<32x128xf32> to vector<32x128xbf16>
    %c0_3 = arith.constant 0 : index
    %c0_4 = arith.constant 0 : index
    %c0_5 = arith.constant 0 : index
    %6 = vector.load %arg5[%c0_3, %c0_4, %c0_5] : memref<1x128x128xbf16, #tpu.memory_space<vmem>>, vector<1x128x128xbf16>
    %7 = vector.shape_cast %6 : vector<1x128x128xbf16> to vector<128x128xbf16>
    %cst = arith.constant dense<0.000000e+00> : vector<32x128xf32>
    %8 = tpu.matmul %5, %7, %cst {dimension_numbers = #tpu.dot_dimension_numbers<[1], [0], [0], [1], [0, 0, 1, 1], [], []>} : vector<32x128xbf16>, vector<128x128xbf16>, vector<32x128xf32> -> vector<32x128xf32>
    %c0_6 = arith.constant 0 : index
    %c0_7 = arith.constant 0 : index
    %c0_8 = arith.constant 0 : index
    %9 = vector.load %arg6[%c0_6, %c0_7, %c0_8] : memref<1x1x128xf32, #tpu.memory_space<vmem>>, vector<1x1x128xf32>
    %10 = vector.shape_cast %9 : vector<1x1x128xf32> to vector<1x128xf32>
    %11 = vector.broadcast %10 : vector<1x128xf32> to vector<32x128xf32>
    %12 = arith.addf %8, %11 : vector<32x128xf32>
    %13 = vector.shape_cast %12 : vector<32x128xf32> to vector<2x16x128xf32>
    %14 = vector.extract_strided_slice %13 {offsets = [0, 0, 0], sizes = [2, 16, 32], strides = [1, 1, 1]} : vector<2x16x128xf32> to vector<2x16x32xf32>
    %15 = vector.extract_strided_slice %13 {offsets = [0, 0, 32], sizes = [2, 16, 32], strides = [1, 1, 1]} : vector<2x16x128xf32> to vector<2x16x32xf32>
    %16 = vector.extract_strided_slice %13 {offsets = [0, 0, 64], sizes = [2, 16, 32], strides = [1, 1, 1]} : vector<2x16x128xf32> to vector<2x16x32xf32>
    %17 = arith.truncf %14 : vector<2x16x32xf32> to vector<2x16x32xbf16>
    %18 = arith.truncf %15 : vector<2x16x32xf32> to vector<2x16x32xbf16>
    %cst_9 = arith.constant dense<0.000000e+00> : vector<2x16x16xf32>
    %19 = tpu.matmul %17, %18, %cst_9 {dimension_numbers = #tpu.dot_dimension_numbers<[2], [2], [1], [1], [0, 0, 0, 1, 1, 1], [0], [0]>} : vector<2x16x32xbf16>, vector<2x16x32xbf16>, vector<2x16x16xf32> -> vector<2x16x16xf32>
    %cst_10 = arith.constant dense<0xFF800000> : vector<2x16xf32>
    %20 = vector.multi_reduction <maximumf>, %19, %cst_10 [2] : vector<2x16x16xf32> to vector<2x16xf32>
    %21 = vector.shape_cast %20 : vector<2x16xf32> to vector<2x16x1xf32>
    %22 = vector.broadcast %21 : vector<2x16x1xf32> to vector<2x16x16xf32>
    %23 = arith.subf %19, %22 : vector<2x16x16xf32>
    %24 = math.exp %23 : vector<2x16x16xf32>
    %cst_11 = arith.constant dense<0.000000e+00> : vector<2x16xf32>
    %25 = vector.multi_reduction <add>, %24, %cst_11 [2] : vector<2x16x16xf32> to vector<2x16xf32>
    %26 = vector.shape_cast %25 : vector<2x16xf32> to vector<2x16x1xf32>
    %27 = vector.broadcast %26 : vector<2x16x1xf32> to vector<2x16x16xf32>
    %28 = arith.divf %24, %27 : vector<2x16x16xf32>
    %29 = arith.truncf %28 : vector<2x16x16xf32> to vector<2x16x16xbf16>
    %30 = arith.truncf %16 : vector<2x16x32xf32> to vector<2x16x32xbf16>
    %cst_12 = arith.constant dense<0.000000e+00> : vector<2x16x32xf32>
    %31 = tpu.matmul %29, %30, %cst_12 {dimension_numbers = #tpu.dot_dimension_numbers<[2], [1], [1], [2], [0, 0, 0, 1, 1, 2], [0], [0]>} : vector<2x16x16xbf16>, vector<2x16x32xbf16>, vector<2x16x32xf32> -> vector<2x16x32xf32>
    %32 = vector.shape_cast %31 : vector<2x16x32xf32> to vector<32x32xf32>
    %33 = arith.truncf %32 : vector<32x32xf32> to vector<32x32xbf16>
    %c0_13 = arith.constant 0 : index
    %c0_14 = arith.constant 0 : index
    %c0_15 = arith.constant 0 : index
    %34 = vector.load %arg7[%c0_13, %c0_14, %c0_15] : memref<1x32x128xbf16, #tpu.memory_space<vmem>>, vector<1x32x128xbf16>
    %35 = vector.shape_cast %34 : vector<1x32x128xbf16> to vector<32x128xbf16>
    %cst_16 = arith.constant dense<0.000000e+00> : vector<32x128xf32>
    %36 = tpu.matmul %33, %35, %cst_16 {dimension_numbers = #tpu.dot_dimension_numbers<[1], [0], [0], [1], [0, 0, 1, 1], [], []>} : vector<32x32xbf16>, vector<32x128xbf16>, vector<32x128xf32> -> vector<32x128xf32>
    %c0_17 = arith.constant 0 : index
    %c0_18 = arith.constant 0 : index
    %c0_19 = arith.constant 0 : index
    %37 = vector.load %arg8[%c0_17, %c0_18, %c0_19] : memref<1x3x128xf32, #tpu.memory_space<vmem>>, vector<1x1x128xf32>
    %38 = vector.shape_cast %37 : vector<1x1x128xf32> to vector<1x128xf32>
    %39 = vector.broadcast %38 : vector<1x128xf32> to vector<32x128xf32>
    %40 = arith.addf %36, %39 : vector<32x128xf32>
    %41 = vector.shape_cast %40 : vector<32x128xf32> to vector<2x16x128xf32>
    %42 = arith.addf %41, %3 : vector<2x16x128xf32>
    %c0_20 = arith.constant 0 : index
    %c1 = arith.constant 1 : index
    %c0_21 = arith.constant 0 : index
    %43 = vector.load %arg8[%c0_20, %c1, %c0_21] : memref<1x3x128xf32, #tpu.memory_space<vmem>>, vector<1x1x128xf32>
    %44 = vector.shape_cast %43 : vector<1x1x128xf32> to vector<1x128xf32>
    %c0_22 = arith.constant 0 : index
    %c2 = arith.constant 2 : index
    %c0_23 = arith.constant 0 : index
    %45 = vector.load %arg8[%c0_22, %c2, %c0_23] : memref<1x3x128xf32, #tpu.memory_space<vmem>>, vector<1x1x128xf32>
    %46 = vector.shape_cast %45 : vector<1x1x128xf32> to vector<1x128xf32>
    %cst_24 = arith.constant dense<0.000000e+00> : vector<2x16xf32>
    %47 = vector.multi_reduction <add>, %42, %cst_24 [2] : vector<2x16x128xf32> to vector<2x16xf32>
    %48 = vector.shape_cast %47 : vector<2x16xf32> to vector<2x16x1xf32>
    %cst_25 = arith.constant 1.280000e+02 : f32
    %49 = vector.broadcast %cst_25 : f32 to vector<2x16x1xf32>
    %50 = arith.divf %48, %49 : vector<2x16x1xf32>
    %51 = vector.broadcast %50 : vector<2x16x1xf32> to vector<2x16x128xf32>
    %52 = arith.subf %42, %51 : vector<2x16x128xf32>
    %53 = arith.mulf %52, %52 : vector<2x16x128xf32>
    %cst_26 = arith.constant dense<0.000000e+00> : vector<2x16xf32>
    %54 = vector.multi_reduction <add>, %53, %cst_26 [2] : vector<2x16x128xf32> to vector<2x16xf32>
    %55 = vector.shape_cast %54 : vector<2x16xf32> to vector<2x16x1xf32>
    %cst_27 = arith.constant 1.280000e+02 : f32
    %56 = vector.broadcast %cst_27 : f32 to vector<2x16x1xf32>
    %57 = arith.divf %55, %56 : vector<2x16x1xf32>
    %58 = vector.broadcast %50 : vector<2x16x1xf32> to vector<2x16x128xf32>
    %59 = arith.subf %42, %58 : vector<2x16x128xf32>
    %cst_28 = arith.constant 9.99999974E-6 : f32
    %60 = vector.broadcast %cst_28 : f32 to vector<2x16x1xf32>
    %61 = arith.addf %57, %60 : vector<2x16x1xf32>
    %62 = math.rsqrt %61 : vector<2x16x1xf32>
    %63 = vector.broadcast %62 : vector<2x16x1xf32> to vector<2x16x128xf32>
    %64 = arith.mulf %59, %63 : vector<2x16x128xf32>
    %65 = vector.shape_cast %44 : vector<1x128xf32> to vector<1x1x128xf32>
    %66 = vector.broadcast %65 : vector<1x1x128xf32> to vector<2x16x128xf32>
    %67 = arith.mulf %64, %66 : vector<2x16x128xf32>
    %68 = vector.shape_cast %46 : vector<1x128xf32> to vector<1x1x128xf32>
    %69 = vector.broadcast %68 : vector<1x1x128xf32> to vector<2x16x128xf32>
    %70 = arith.addf %67, %69 : vector<2x16x128xf32>
    %c0_29 = arith.constant 0 : index
    %c0_30 = arith.constant 0 : index
    %c0_31 = arith.constant 0 : index
    %71 = vector.load %arg9[%c0_29, %c0_30, %c0_31] : memref<2x16x128xf32, #tpu.memory_space<vmem>>, vector<2x16x128xf32>
    tpu.vector_store %arg9[%c0_29, %c0_30, %c0_31], %70 {strides = array<i32>} : memref<2x16x128xf32, #tpu.memory_space<vmem>>, vector<2x16x128xf32>,
    return
  }
  func.func @transform_0(%arg0: i32, %arg1: i32) -> (i32, i32, i32) {
    %c0_i32 = arith.constant 0 : i32
    %c0_i32_0 = arith.constant 0 : i32
    %c0_i32_1 = arith.constant 0 : i32
    return %arg0, %c0_i32, %c0_i32_0 : i32, i32, i32
  }
  func.func @transform_1(%arg0: i32, %arg1: i32) -> (i32, i32) {
    %c0_i32 = arith.constant 0 : i32
    %c0_i32_0 = arith.constant 0 : i32
    %c0_i32_1 = arith.constant 0 : i32
    return %c0_i32, %c0_i32_0 : i32, i32
  }
  func.func @transform_2(%arg0: i32, %arg1: i32) -> (i32, i32) {
    %c0_i32 = arith.constant 0 : i32
    %c0_i32_0 = arith.constant 0 : i32
    %c0_i32_1 = arith.constant 0 : i32
    return %c0_i32, %c0_i32_0 : i32, i32
  }
  func.func @transform_3(%arg0: i32, %arg1: i32) -> (i32, i32, i32) {
    %c0_i32 = arith.constant 0 : i32
    %c0_i32_0 = arith.constant 0 : i32
    %c0_i32_1 = arith.constant 0 : i32
    return %arg1, %c0_i32, %c0_i32_0 : i32, i32, i32
  }
  func.func @transform_4(%arg0: i32, %arg1: i32) -> (i32, i32, i32) {
    %c0_i32 = arith.constant 0 : i32
    %c0_i32_0 = arith.constant 0 : i32
    %c0_i32_1 = arith.constant 0 : i32
    return %arg1, %c0_i32, %c0_i32_0 : i32, i32, i32
  }
  func.func @transform_5(%arg0: i32, %arg1: i32) -> (i32, i32, i32) {
    %c0_i32 = arith.constant 0 : i32
    %c0_i32_0 = arith.constant 0 : i32
    %c0_i32_1 = arith.constant 0 : i32
    return %arg1, %c0_i32, %c0_i32_0 : i32, i32, i32
  }
  func.func @transform_6(%arg0: i32, %arg1: i32) -> (i32, i32, i32) {
    %c0_i32 = arith.constant 0 : i32
    %c0_i32_0 = arith.constant 0 : i32
    %c0_i32_1 = arith.constant 0 : i32
    return %arg1, %c0_i32, %c0_i32_0 : i32, i32, i32
  }
  func.func @transform_7(%arg0: i32, %arg1: i32) -> (i32, i32, i32) {
    %c0_i32 = arith.constant 0 : i32
    %c0_i32_0 = arith.constant 0 : i32
    %c0_i32_1 = arith.constant 0 : i32
    return %arg0, %c0_i32, %c0_i32_0 : i32, i32, i32
  }
}

</mosaic_0001>

<llo_original>
// kernel: tpu_custom_call.1
$region0: #{tpu_custom_call.1}
  #allocation0 [shape = 'u32[]', space=smem, size = 0x4, offset = 0x4, fixed_abs, tag = 'smem constant byte address 0x4 - core index']
  #allocation1 [shape = 'u32[144,128]{1,0:T(1,128)}', space=vmem, size = 0x12000, scoped, tag = 'internal scratch']
  %s0 = inlined_call_operand.vmem [shape: bf16[4,16,4], index: 0, kind: input, shape index: {}]
  %s1 = inlined_call_operand.vmem [shape: bf16[4,128], index: 1, kind: input, shape index: {}]
  %s2 = inlined_call_operand.vmem [shape: f32[3,128], index: 2, kind: input, shape index: {}]
  %s3 = inlined_call_operand.hbm [shape: bf16[2,128,128], index: 3, kind: input, shape index: {}]
  %s4 = inlined_call_operand.vmem [shape: f32[2,1,128], index: 4, kind: input, shape index: {}]
  %s5 = inlined_call_operand.vmem [shape: bf16[2,32,128], index: 5, kind: input, shape index: {}]
  %s6 = inlined_call_operand.vmem [shape: f32[2,3,128], index: 6, kind: input, shape index: {}]
  %s7 = inlined_call_operand.hbm [shape: f32[4,16,128], index: 7, kind: output, shape index: {}]
  %s8 = sld [smem:[#allocation0]]
  $region69: #{tpu_custom_call.1} parent=0
    _
  %s10 = ssub.s32 1, %s8
  %s11 = scalar_select 0, %s10, %s8
  $region1: #{tpu_custom_call.1} parent=0
    #allocation2 [shape = 'u8[65536]{0}', space=vmem, size = 0x10000, scoped, tag = 'input window, operand 3']
    #allocation3 [shape = 's32[2]{0}', space=sflag, size = 0x8, scoped, tag = 'scoped memory for tpu_custom_call.1']
    #allocation4 [shape = 's32[2]{0}', space=sflag, size = 0x8, scoped, tag = 'scoped memory for tpu_custom_call.1']
    #allocation5 [shape = 'u8[32768]{0}', space=vmem, size = 0x8000, scoped, tag = 'output window, operand 0']
    %12 = vsyncpa [#allocation3], 0
    %s13 = scalar_lea.sflag [#allocation3], 1
    %14 = vsyncpa %s13, 0
    %15 = vsyncpa [#allocation4], 0
    %s16 = scalar_lea.sflag [#allocation4], 1
    %17 = vsyncpa %s16, 0
    loop: start=0, step=1, limit=6
    $region2: #{tpu_custom_call.1} parent=1 // loop_pre_header
      _
    $region3: #{tpu_custom_call.1} parent=1 // loop_header
      %s19 = sphi 0, %s23
      %p20 = scmp.ge.s32.totalorder %s19, 6
      %s26 = sphi 0, %s38
      %s27 = sphi 0, %s34
      %s28 = sphi 0, %s26
      %s29 = sphi 0, %s27
      %s30 = sphi 0, %s28
      %s31 = sphi 0, %s29
      %s41 = sphi 0, %s43
      %s44 = sphi 0, %s41
      %s45 = sphi 0, %s44
      %s61 = sphi 0, %s45
      %s65 = sphi 0, %s65
      %s67 = sphi 0, %s65
      %s68 = sphi 0, %s67
      %s82 = sphi 0, %s68
      %s86 = sphi 0, %s86
      %s88 = sphi 0, %s86
      %s89 = sphi 0, %s88
      %s103 = sphi 0, %s89
      %s109 = sphi 0, %s111
      %s112 = sphi 0, %s109
      %s113 = sphi 0, %s112
      %s129 = sphi 0, %s113
      %s135 = sphi 0, %s137
      %s138 = sphi 0, %s135
      %s139 = sphi 0, %s138
      %s155 = sphi 0, %s139
      %s161 = sphi 0, %s163
      %s164 = sphi 0, %s161
      %s165 = sphi 0, %s164
      %s181 = sphi 0, %s165
      %s187 = sphi 0, %s189
      %s190 = sphi 0, %s187
      %s191 = sphi 0, %s190
      %s207 = sphi 0, %s191
      %s213 = sphi 0, %s215
      %s216 = sphi 0, %s213
      %s217 = sphi 0, %s216
      %s233 = sphi 0, %s217
    $region4: #{tpu_custom_call.1} parent=1 // loop_header_branch
      %22 = sbr.rel (%p20) target = $region8
    $region5: #{tpu_custom_call.1} parent=1 // loop_body
      %s24 = ssub.s32 %s19, 1
      %s25 = ssub.s32 %s19, 2
      %s32 = sadd.s32 1, %s27
      %p33 = scmp.ge.s32.totalorder %s32, 2
      %s34 = scalar_select %p33, 0, %s32
      %s35 = sadd.s32 1, %s26
      %s36 = scalar_select %p33, %s35, %s26
      %p37 = scmp.ge.s32.totalorder %s36, 2
      %s38 = scalar_select %p37, 0, %s36
      %s39 = ssub.s32 %s26, %s38
      %p40 = scmp.eq.s32.totalorder %s39, 0
      %s42 = sadd.s32 %s41, 1
      %s43 = scalar_select %p40, %s41, %s42
      %p46 = pneg %p40
      %p47 = scmp.eq.s32.totalorder %s19, 3
      %p48 = por %p46, %p47
      %p49 = scmp.ne.s32.totalorder %s41, %s44
      %p50 = scmp.eq.s32.totalorder %s19, 0
      %p51 = por %p49, %p50
      %p52 = scmp.ne.s32.totalorder %s41, %s44
      %p53 = scmp.eq.s32.totalorder %s24, 3
      %p54 = por %p52, %p53
      %p55 = scmp.ne.s32.totalorder %s44, %s45
      %p56 = scmp.eq.s32.totalorder %s24, 0
      %p57 = por %p55, %p56
      %p58 = scmp.ne.s32.totalorder %s44, %s45
      %p59 = scmp.eq.s32.totalorder %s25, 3
      %p60 = por %p58, %p59
      %p62 = scmp.ne.s32.totalorder %s45, %s61
      %p63 = scmp.eq.s32.totalorder %s25, 0
      %p64 = por %p62, %p63
      %s66 = sadd.s32 %s65, 1
      %p69 = scmp.eq.s32.totalorder %s19, 3
      %p70 = scmp.ne.s32.totalorder %s65, %s67
      %p71 = scmp.eq.s32.totalorder %s19, 0
      %p72 = por %p70, %p71
      %p73 = scmp.ne.s32.totalorder %s65, %s67
      %p74 = scmp.eq.s32.totalorder %s24, 3
      %p75 = por %p73, %p74
      %p76 = scmp.ne.s32.totalorder %s67, %s68
      %p77 = scmp.eq.s32.totalorder %s24, 0
      %p78 = por %p76, %p77
      %p79 = scmp.ne.s32.totalorder %s67, %s68
      %p80 = scmp.eq.s32.totalorder %s25, 3
      %p81 = por %p79, %p80
      %p83 = scmp.ne.s32.totalorder %s68, %s82
      %p84 = scmp.eq.s32.totalorder %s25, 0
      %p85 = por %p83, %p84
      %s87 = sadd.s32 %s86, 1
      %p90 = scmp.eq.s32.totalorder %s19, 3
      %p91 = scmp.ne.s32.totalorder %s86, %s88
      %p92 = scmp.eq.s32.totalorder %s19, 0
      %p93 = por %p91, %p92
      %p94 = scmp.ne.s32.totalorder %s86, %s88
      %p95 = scmp.eq.s32.totalorder %s24, 3
      %p96 = por %p94, %p95
      %p97 = scmp.ne.s32.totalorder %s88, %s89
      %p98 = scmp.eq.s32.totalorder %s24, 0
      %p99 = por %p97, %p98
      %p100 = scmp.ne.s32.totalorder %s88, %s89
      %p101 = scmp.eq.s32.totalorder %s25, 3
      %p102 = por %p100, %p101
      %p104 = scmp.ne.s32.totalorder %s89, %s103
      %p105 = scmp.eq.s32.totalorder %s25, 0
      %p106 = por %p104, %p105
      %s107 = ssub.s32 %s27, %s34
      %p108 = scmp.eq.s32.totalorder %s107, 0
      %s110 = sadd.s32 %s109, 1
      %s111 = scalar_select %p108, %s109, %s110
      %p114 = pneg %p108
      %p115 = scmp.eq.s32.totalorder %s19, 3
      %p116 = por %p114, %p115
      %p117 = scmp.ne.s32.totalorder %s109, %s112
      %p118 = scmp.eq.s32.totalorder %s19, 0
      %p119 = por %p117, %p118
      %p120 = scmp.ne.s32.totalorder %s109, %s112
      %p121 = scmp.eq.s32.totalorder %s24, 3
      %p122 = por %p120, %p121
      %p123 = scmp.ne.s32.totalorder %s112, %s113
      %p124 = scmp.eq.s32.totalorder %s24, 0
      %p125 = por %p123, %p124
      %p126 = scmp.ne.s32.totalorder %s112, %s113
      %p127 = scmp.eq.s32.totalorder %s25, 3
      %p128 = por %p126, %p127
      %p130 = scmp.ne.s32.totalorder %s113, %s129
      %p131 = scmp.eq.s32.totalorder %s25, 0
      %p132 = por %p130, %p131
      %s133 = ssub.s32 %s27, %s34
      %p134 = scmp.eq.s32.totalorder %s133, 0
      %s136 = sadd.s32 %s135, 1
      %s137 = scalar_select %p134, %s135, %s136
      %p140 = pneg %p134
      %p141 = scmp.eq.s32.totalorder %s19, 3
      %p142 = por %p140, %p141
      %p143 = scmp.ne.s32.totalorder %s135, %s138
      %p144 = scmp.eq.s32.totalorder %s19, 0
      %p145 = por %p143, %p144
      %p146 = scmp.ne.s32.totalorder %s135, %s138
      %p147 = scmp.eq.s32.totalorder %s24, 3
      %p148 = por %p146, %p147
      %p149 = scmp.ne.s32.totalorder %s138, %s139
      %p150 = scmp.eq.s32.totalorder %s24, 0
      %p151 = por %p149, %p150
      %p152 = scmp.ne.s32.totalorder %s138, %s139
      %p153 = scmp.eq.s32.totalorder %s25, 3
      %p154 = por %p152, %p153
      %p156 = scmp.ne.s32.totalorder %s139, %s155
      %p157 = scmp.eq.s32.totalorder %s25, 0
      %p158 = por %p156, %p157
      %s159 = ssub.s32 %s27, %s34
      %p160 = scmp.eq.s32.totalorder %s159, 0
      %s162 = sadd.s32 %s161, 1
      %s163 = scalar_select %p160, %s161, %s162
      %p166 = pneg %p160
      %p167 = scmp.eq.s32.totalorder %s19, 3
      %p168 = por %p166, %p167
      %p169 = scmp.ne.s32.totalorder %s161, %s164
      %p170 = scmp.eq.s32.totalorder %s19, 0
      %p171 = por %p169, %p170
      %p172 = scmp.ne.s32.totalorder %s161, %s164
      %p173 = scmp.eq.s32.totalorder %s24, 3
      %p174 = por %p172, %p173
      %p175 = scmp.ne.s32.totalorder %s164, %s165
      %p176 = scmp.eq.s32.totalorder %s24, 0
      %p177 = por %p175, %p176
      %p178 = scmp.ne.s32.totalorder %s164, %s165
      %p179 = scmp.eq.s32.totalorder %s25, 3
      %p180 = por %p178, %p179
      %p182 = scmp.ne.s32.totalorder %s165, %s181
      %p183 = scmp.eq.s32.totalorder %s25, 0
      %p184 = por %p182, %p183
      %s185 = ssub.s32 %s27, %s34
      %p186 = scmp.eq.s32.totalorder %s185, 0
      %s188 = sadd.s32 %s187, 1
      %s189 = scalar_select %p186, %s187, %s188
      %p192 = pneg %p186
      %p193 = scmp.eq.s32.totalorder %s19, 3
      %p194 = por %p192, %p193
      %p195 = scmp.ne.s32.totalorder %s187, %s190
      %p196 = scmp.eq.s32.totalorder %s19, 0
      %p197 = por %p195, %p196
      %p198 = scmp.ne.s32.totalorder %s187, %s190
      %p199 = scmp.eq.s32.totalorder %s24, 3
      %p200 = por %p198, %p199
      %p201 = scmp.ne.s32.totalorder %s190, %s191
      %p202 = scmp.eq.s32.totalorder %s24, 0
      %p203 = por %p201, %p202
      %p204 = scmp.ne.s32.totalorder %s190, %s191
      %p205 = scmp.eq.s32.totalorder %s25, 3
      %p206 = por %p204, %p205
      %p208 = scmp.ne.s32.totalorder %s191, %s207
      %p209 = scmp.eq.s32.totalorder %s25, 0
      %p210 = por %p208, %p209
      %s211 = ssub.s32 %s26, %s38
      %p212 = scmp.eq.s32.totalorder %s211, 0
      %s214 = sadd.s32 %s213, 1
      %s215 = scalar_select %p212, %s213, %s214
      %p218 = pneg %p212
      %p219 = scmp.eq.s32.totalorder %s19, 3
      %p220 = por %p218, %p219
      %p221 = scmp.ne.s32.totalorder %s213, %s216
      %p222 = scmp.eq.s32.totalorder %s19, 0
      %p223 = por %p221, %p222
      %p224 = scmp.ne.s32.totalorder %s213, %s216
      %p225 = scmp.eq.s32.totalorder %s24, 3
      %p226 = por %p224, %p225
      %p227 = scmp.ne.s32.totalorder %s216, %s217
      %p228 = scmp.eq.s32.totalorder %s24, 0
      %p229 = por %p227, %p228
      %p230 = scmp.ne.s32.totalorder %s216, %s217
      %p231 = scmp.eq.s32.totalorder %s25, 3
      %p232 = por %p230, %p231
      %p234 = scmp.ne.s32.totalorder %s217, %s233
      %p235 = scmp.eq.s32.totalorder %s25, 0
      %p236 = por %p234, %p235
      %p237 = scmp.le.s32.totalorder 1, %s19
      %p238 = scmp.lt.s32.totalorder %s19, 5
      %p239 = pnand %p237, %p238
      %p240 = pneg %p239
      // Predicated region
      $region9: #{tpu_custom_call.1} parent=5 // pred_check
        _
      $region10: #{tpu_custom_call.1} parent=5 // pred_check_branch
        %242 = sbr.rel (%p239) target = $region12
      $region11: #{tpu_custom_call.1} parent=5 // pred_region
        %s243 = ssub.s32 %s19, 1
        // Predicated region
        $region13: #{tpu_custom_call.1} parent=11 // pred_check
          %p244 = pneg %p78
        $region14: #{tpu_custom_call.1} parent=11 // pred_check_branch
          %246 = sbr.rel (%p244) target = $region16
        $region15: #{tpu_custom_call.1} parent=11 // pred_region
          _
        $region16: #{tpu_custom_call.1} parent=11 // pred_fallthru
          _
        // Predicated region
        $region17: #{tpu_custom_call.1} parent=11 // pred_check
          %p247 = pneg %p99
        $region18: #{tpu_custom_call.1} parent=11 // pred_check_branch
          %249 = sbr.rel (%p247) target = $region20
        $region19: #{tpu_custom_call.1} parent=11 // pred_region
          _
        $region20: #{tpu_custom_call.1} parent=11 // pred_fallthru
          _
      $region12: #{tpu_custom_call.1} parent=5 // pred_fallthru
        _
      %p250 = scmp.lt.s32.totalorder %s19, 4
      // Predicated region
      $region21: #{tpu_custom_call.1} parent=5 // pred_check
        %p251 = pneg %p250
      $region22: #{tpu_custom_call.1} parent=5 // pred_check_branch
        %253 = sbr.rel (%p251) target = $region24
      $region23: #{tpu_custom_call.1} parent=5 // pred_region
        // Predicated region
        $region25: #{tpu_custom_call.1} parent=23 // pred_check
          %p254 = pneg %p51
        $region26: #{tpu_custom_call.1} parent=23 // pred_check_branch
          %256 = sbr.rel (%p254) target = $region28
        $region27: #{tpu_custom_call.1} parent=23 // pred_region
          %s257 = smul.u32 2, %s26
          %p258 = scmp.lt.s32.totalorder %s257, 3
          %s259 = scalar_select %p258, %s257, 3
          %s260 = smul.addr %s259, 2
          %s261 = smul.addr %s260, 4
          %s262 = scalar_lea.vmem %s0, %s261
          %s263 = smul.u32 2, %s26
        $region28: #{tpu_custom_call.1} parent=23 // pred_fallthru
          _
        // Predicated region
        $region29: #{tpu_custom_call.1} parent=23 // pred_check
          %p264 = pneg %p119
        $region30: #{tpu_custom_call.1} parent=23 // pred_check_branch
          %266 = sbr.rel (%p264) target = $region32
        $region31: #{tpu_custom_call.1} parent=23 // pred_region
          %s267 = sand.u32 %s109, 1
          %s268 = scalar_lea.sflag [#allocation3], %s267
          %s269 = sand.u32 %s109, 1
          %s270 = smul.addr %s269, 64
          %s271 = scalar_lea.vmem [#allocation2], %s270
          %s273 = ssub.s32 1024, 1024
          %274 = vsyncadd %s268, %s273
          %s275 = smul.addr %s27, 16
          %s276 = smul.addr %s275, 64
          %s277 = scalar_lea.hbm %s3, %s276
          %s278 = sshll.u32 %s271, 4
          %s279 = int_to_ptr.vmem [resolvable:$true] %s278
          %284 = dma.hbm_to_vmem [thread:$0]  %s277, 1024, %s279, %s268, 64, 64, 4
        $region32: #{tpu_custom_call.1} parent=23 // pred_fallthru
          _
        // Predicated region
        $region33: #{tpu_custom_call.1} parent=23 // pred_check
          %p285 = pneg %p145
        $region34: #{tpu_custom_call.1} parent=23 // pred_check_branch
          %287 = sbr.rel (%p285) target = $region36
        $region35: #{tpu_custom_call.1} parent=23 // pred_region
          %p288 = scmp.lt.s32.totalorder %s27, 1
          %s289 = scalar_select %p288, %s27, 1
          %s290 = scalar_lea.vmem %s4, %s289
        $region36: #{tpu_custom_call.1} parent=23 // pred_fallthru
          _
        // Predicated region
        $region37: #{tpu_custom_call.1} parent=23 // pred_check
          %p291 = pneg %p171
        $region38: #{tpu_custom_call.1} parent=23 // pred_check_branch
          %293 = sbr.rel (%p291) target = $region40
        $region39: #{tpu_custom_call.1} parent=23 // pred_region
          %p294 = scmp.lt.s32.totalorder %s27, 1
          %s295 = scalar_select %p294, %s27, 1
          %s296 = smul.addr %s295, 4
          %s297 = smul.addr %s296, 4
          %s298 = scalar_lea.vmem %s5, %s297
        $region40: #{tpu_custom_call.1} parent=23 // pred_fallthru
          _
        // Predicated region
        $region41: #{tpu_custom_call.1} parent=23 // pred_check
          %p299 = pneg %p197
        $region42: #{tpu_custom_call.1} parent=23 // pred_check_branch
          %301 = sbr.rel (%p299) target = $region44
        $region43: #{tpu_custom_call.1} parent=23 // pred_region
          %p302 = scmp.lt.s32.totalorder %s27, 1
          %s303 = scalar_select %p302, %s27, 1
          %s304 = smul.addr %s303, 4
          %s305 = scalar_lea.vmem %s6, %s304
        $region44: #{tpu_custom_call.1} parent=23 // pred_fallthru
          _
      $region24: #{tpu_custom_call.1} parent=5 // pred_fallthru
        _
      %p306 = scmp.le.s32.totalorder 1, %s19
      %p307 = scmp.lt.s32.totalorder %s19, 5
      %p308 = pnand %p306, %p307
      %p309 = pneg %p308
      // Predicated region
      $region45: #{tpu_custom_call.1} parent=5 // pred_check
        _
      $region46: #{tpu_custom_call.1} parent=5 // pred_check_branch
        %311 = sbr.rel (%p308) target = $region48
      $region47: #{tpu_custom_call.1} parent=5 // pred_region
        %s312 = ssub.s32 %s19, 1
        %s313 = sand.u32 %s112, 1
        %s314 = scalar_lea.sflag [#allocation3], %s313
        %s315 = sand.u32 %s112, 1
        %s316 = smul.addr %s315, 64
        %s317 = scalar_lea.vmem [#allocation2], %s316
        // Predicated region
        $region49: #{tpu_custom_call.1} parent=47 // pred_check
          %p318 = pneg %p125
        $region50: #{tpu_custom_call.1} parent=47 // pred_check_branch
          %320 = sbr.rel (%p318) target = $region52
        $region51: #{tpu_custom_call.1} parent=47 // pred_region
          %321 = dma.done %s314, 1024
        $region52: #{tpu_custom_call.1} parent=47 // pred_fallthru
          _
        %s322 = smul.u32 2, %s28
        %p323 = scmp.lt.s32.totalorder %s322, 3
        %s324 = scalar_select %p323, %s322, 3
        %s325 = smul.addr %s324, 2
        %s326 = smul.addr %s325, 4
        %s327 = scalar_lea.vmem %s0, %s326
        %p328 = pneg %p57
        %p329 = pneg %p54
        %p330 = pneg %p78
        %p331 = pneg %p75
        %p332 = pneg %p99
        %p333 = pneg %p96
        %s334 = sand.u32 %s112, 1
        %s335 = scalar_lea.sflag [#allocation3], %s334
        %s336 = sand.u32 %s112, 1
        %s337 = smul.addr %s336, 64
        %s338 = scalar_lea.vmem [#allocation2], %s337
        %p339 = pneg %p125
        %p340 = pneg %p122
        %p341 = scmp.lt.s32.totalorder %s29, 1
        %s342 = scalar_select %p341, %s29, 1
        %s343 = scalar_lea.vmem %s4, %s342
        %p344 = pneg %p151
        %p345 = pneg %p148
        %p346 = scmp.lt.s32.totalorder %s29, 1
        %s347 = scalar_select %p346, %s29, 1
        %s348 = smul.addr %s347, 4
        %s349 = smul.addr %s348, 4
        %s350 = scalar_lea.vmem %s5, %s349
        %p351 = pneg %p177
        %p352 = pneg %p174
        %p353 = scmp.lt.s32.totalorder %s29, 1
        %s354 = scalar_select %p353, %s29, 1
        %s355 = smul.addr %s354, 4
        %s356 = scalar_lea.vmem %s6, %s355
        %p357 = pneg %p203
        %p358 = pneg %p200
        %p359 = pneg %p229
        %p360 = pneg %p226
        %s361 = sand.u32 %s216, 1
        %s362 = scalar_lea.sflag [#allocation4], %s361
        %s363 = sand.u32 %s216, 1
        %s364 = smul.addr %s363, 32
        %s365 = scalar_lea.vmem [#allocation5], %s364
        %s366 = smul.u32 2, %s28
        %p367 = scmp.lt.s32.totalorder %s366, 3
        %s368 = scalar_select %p367, %s366, 3
        %s369 = smul.addr %s368, 2
        %s370 = smul.addr %s369, 4
        %s371 = scalar_lea.vmem %s0, %s370
        %s372 = smul.u32 2, %s28
        %p373 = scmp.lt.s32.totalorder %s29, 1
        %s374 = scalar_select %p373, %s29, 1
        %s375 = scalar_lea.vmem %s4, %s374
        %p376 = scmp.lt.s32.totalorder %s29, 1
        %s377 = scalar_select %p376, %s29, 1
        %s378 = smul.addr %s377, 4
        %s379 = smul.addr %s378, 4
        %s380 = scalar_lea.vmem %s5, %s379
        %p381 = scmp.lt.s32.totalorder %s29, 1
        %s382 = scalar_select %p381, %s29, 1
        %s383 = smul.addr %s382, 4
        %s384 = scalar_lea.vmem %s6, %s383
        %s385 = smul.u32 2, %s28
        %p387 = scmp.eq.s32.totalorder %s29, 0
        // Predicated region
        $region53: #{tpu_custom_call.1} parent=47 // pred_check
          %p388 = pneg %p387
        $region54: #{tpu_custom_call.1} parent=47 // pred_check_branch
          %390 = sbr.rel (%p388) target = $region56
        $region55: #{tpu_custom_call.1} parent=47 // pred_region
          %v391 = vld [vmem:[%s371] sm:$0xf]
          %v392 = vld [vmem:[%s371 + $0x4] sm:$0xf]
          %v393 = vld [vmem:[%s371 + $0x8] sm:$0xf]
          %v394 = vld [vmem:[%s371 + $0xc] sm:$0xf]
          %v395 = vld [vmem:[%s1] sm:$0x3]
          %v396 = vld [vmem:[%s2] sm:$0x1]
          %v397 = vlaneseq
          %v398 = vshrl.u32 %v397, 7
          %v399 = vsub.s32 0, %v398
          %v400 = vrot.slane %v396, %v399
          %v405 = vunpack.c.l.b16 %v391
          %v406 = vunpack.c.l.b16 %v392
          %v407 = vunpack.c.l.b16 %v393
          %v408 = vunpack.c.l.b16 %v394
          %v409 = vpack.c.b16 %v406, %v405
          %v410 = vpack.c.b16 %v408, %v407
          %vm411 = vcmask 31744
          %v413 = vsel %vm411, %v409, 0
          %v416 = vsel %vm411, %v410, 0
          %vm418 = vcmask 1041408
          %v420 = vsel %vm418, %v395, 0
          %422 = vmatprep.subr.bf16.mxu0 0
          %423 = vmatpush1.bf16.msra.mxu0 %v420
          %424 = vmatprep.subr.bf16.mxu0 0
          %425 = vmatpush1.bf16.msra.mxu0 0
          %426 = vmatprep.subr.bf16.mxu0 0
          %427 = vmatpush1.bf16.msra.mxu0 0
          %428 = vmatprep.subr.bf16.mxu0 0
          %429 = vmatpush1.bf16.msra.mxu0 0
          %430 = vmatprep.subr.bf16.mxu0 0
          %431 = vmatpush1.bf16.msra.mxu0 0
          %432 = vmatprep.subr.bf16.mxu0 0
          %433 = vmatpush1.bf16.msra.mxu0 0
          %434 = vmatprep.subr.bf16.mxu0 0
          %435 = vmatpush1.bf16.msra.mxu0 0
          %436 = vmatprep.subr.bf16.mxu0 0
          %437 = vmatpush1.bf16.msra.mxu0 0
          %438 = vmatprep.subr.bf16.mxu0 0
          %439 = vmatpush1.bf16.msra.mxu0 0
          %440 = vmatprep.subr.bf16.mxu0 0
          %441 = vmatpush1.bf16.msra.mxu0 0
          %442 = vmatprep.subr.bf16.mxu0 0
          %443 = vmatpush1.bf16.msra.mxu0 0
          %444 = vmatprep.subr.bf16.mxu0 0
          %445 = vmatpush1.bf16.msra.mxu0 0
          %446 = vmatprep.subr.bf16.mxu0 0
          %447 = vmatpush1.bf16.msra.mxu0 0
          %448 = vmatprep.subr.bf16.mxu0 0
          %449 = vmatpush1.bf16.msra.mxu0 0
          %450 = vmatprep.subr.bf16.mxu0 0
          %451 = vmatpush1.bf16.msra.mxu0 0
          %452 = vmatprep.subr.bf16.mxu0 0
          %453 = vmatpush1.bf16.msra.mxu0 0
          %454 = vmatprep.mubr.bf16.mxu0 0
          %455 = vmatmul.mubr.bf16.gmra.mrb[0].mxu0 %v413
          %v456 = vpop.f32.mrb[0].mxu0
          %v457 = vadd.f32 %v400, %v456
          %v458 = vpop.f32.mrb[0].mxu0
          %v459 = vpop.f32.mrb[0].mxu0
          %v460 = vadd.f32 %v400, %v459
          %v461 = vpop.f32.mrb[0].mxu0
          %462 = vmatprep.mubr.bf16.mxu0 0
          %463 = vmatmul.mubr.bf16.gmra.mrb[0].mxu0 %v416
          %v464 = vpop.f32.mrb[0].mxu0
          %v465 = vadd.f32 %v400, %v464
          %v466 = vpop.f32.mrb[0].mxu0
          %v467 = vpop.f32.mrb[0].mxu0
          %v468 = vadd.f32 %v400, %v467
          %v469 = vpop.f32.mrb[0].mxu0
          %470 = vdwg.mxu0
          %v471 = vld [vmem:[%s2 + $0x1] sm:$0x1]
          %v472 = vld [vmem:[%s2 + $0x2] sm:$0x1]
          %473 = vadd.xlane.f32.xlu0 %v457
          %v474 = vpop.xlane.xlu0 %473
          %475 = vadd.xlane.f32.xlu0 %v460
          %v476 = vpop.xlane.xlu0 %475
          %477 = vadd.xlane.f32.xlu0 %v465
          %v478 = vpop.xlane.xlu0 %477
          %479 = vadd.xlane.f32.xlu0 %v468
          %v480 = vpop.xlane.xlu0 %479
          %v481 = vrcp.pop 128.0
          %v482 = vmul.f32 %v474, %v481
          %v483 = vmul.f32 %v476, %v481
          %v484 = vmul.f32 %v478, %v481
          %v485 = vmul.f32 %v480, %v481
          %v486 = vsub.f32 %v457, %v482
          %v487 = vsub.f32 %v460, %v483
          %v488 = vsub.f32 %v465, %v484
          %v489 = vsub.f32 %v468, %v485
          %v490 = vmul.f32 %v486, %v486
          %v491 = vmul.f32 %v487, %v487
          %v492 = vmul.f32 %v488, %v488
          %v493 = vmul.f32 %v489, %v489
          %494 = vadd.xlane.f32.xlu0 %v490
          %v495 = vpop.xlane.xlu0 %494
          %496 = vadd.xlane.f32.xlu0 %v491
          %v497 = vpop.xlane.xlu0 %496
          %498 = vadd.xlane.f32.xlu0 %v492
          %v499 = vpop.xlane.xlu0 %498
          %500 = vadd.xlane.f32.xlu0 %v493
          %v501 = vpop.xlane.xlu0 %500
          %v502 = vmul.f32 %v495, %v481
          %v503 = vmul.f32 %v497, %v481
          %v504 = vmul.f32 %v499, %v481
          %v505 = vmul.f32 %v501, %v481
          %v506 = vadd.f32 %v502, 1e-05
          %v507 = vadd.f32 %v503, 1e-05
          %v508 = vadd.f32 %v504, 1e-05
          %v509 = vadd.f32 %v505, 1e-05
          %v510 = vrsqrt.pop %v506
          %v511 = vrsqrt.pop %v507
          %v512 = vrsqrt.pop %v508
          %v513 = vrsqrt.pop %v509
          %v514 = vmul.f32 %v486, %v510
          %v515 = vmul.f32 %v487, %v511
          %v516 = vmul.f32 %v488, %v512
          %v517 = vmul.f32 %v489, %v513
          %v518 = vlaneseq
          %v519 = vshrl.u32 %v518, 7
          %v520 = vsub.s32 0, %v519
          %v521 = vrot.slane %v471, %v520
          %v522 = vmul.f32 %v514, %v521
          %v523 = vmul.f32 %v515, %v521
          %v524 = vmul.f32 %v516, %v521
          %v525 = vmul.f32 %v517, %v521
          %v526 = vlaneseq
          %v527 = vshrl.u32 %v526, 7
          %v528 = vsub.s32 0, %v527
          %v529 = vrot.slane %v472, %v528
          %v530 = vadd.f32 %v522, %v529
          %v531 = vadd.f32 %v523, %v529
          %v532 = vadd.f32 %v524, %v529
          %v533 = vadd.f32 %v525, %v529
          %534 = vst [vmem:[%s365] sm:$0xff] %v530
          %535 = vst [vmem:[%s365 + $0x8] sm:$0xff] %v531
          %536 = vst [vmem:[%s365 + $0x10] sm:$0xff] %v532
          %537 = vst [vmem:[%s365 + $0x18] sm:$0xff] %v533
        $region56: #{tpu_custom_call.1} parent=47 // pred_fallthru
          _
        %v538 = vld [vmem:[%s365] sm:$0xff]
        %v539 = vld [vmem:[%s365 + $0x8] sm:$0xff]
        %v540 = vld [vmem:[%s365 + $0x10] sm:$0xff]
        %v541 = vld [vmem:[%s365 + $0x18] sm:$0xff]
        %v542 = vpack.c.bf16 %v539, %v538
        %v543 = vpack.c.bf16 %v541, %v540
        %v544 = vld [vmem:[%s317] sm:$0xf]
        %v545 = vld [vmem:[%s317 + $0x4] sm:$0xf]
        %v546 = vld [vmem:[%s317 + $0x8] sm:$0xf]
        %v547 = vld [vmem:[%s317 + $0xc] sm:$0xf]
        %v548 = vld [vmem:[%s317 + $0x10] sm:$0xf]
        %v549 = vld [vmem:[%s317 + $0x14] sm:$0xf]
        %v550 = vld [vmem:[%s317 + $0x18] sm:$0xf]
        %v551 = vld [vmem:[%s317 + $0x1c] sm:$0xf]
        %v552 = vld [vmem:[%s317 + $0x20] sm:$0xf]
        %v553 = vld [vmem:[%s317 + $0x24] sm:$0xf]
        %v554 = vld [vmem:[%s317 + $0x28] sm:$0xf]
        %v555 = vld [vmem:[%s317 + $0x2c] sm:$0xf]
        %v556 = vld [vmem:[%s317 + $0x30] sm:$0xf]
        %v557 = vld [vmem:[%s317 + $0x34] sm:$0xf]
        %v558 = vld [vmem:[%s317 + $0x38] sm:$0xf]
        %v559 = vld [vmem:[%s317 + $0x3c] sm:$0xf]
        %v560 = vld [vmem:[%s375] sm:$0x1]
        %v562 = vlaneseq
        %v563 = vshrl.u32 %v562, 7
        %v564 = vsub.s32 0, %v563
        %v565 = vrot.slane %v560, %v564
        %v583 = vunpack.c.l.b16 %v544
        %v584 = vunpack.c.l.b16 %v545
        %v585 = vunpack.c.l.b16 %v546
        %v586 = vunpack.c.l.b16 %v547
        %v587 = vunpack.c.l.b16 %v548
        %v588 = vunpack.c.l.b16 %v549
        %v589 = vunpack.c.l.b16 %v550
        %v590 = vunpack.c.l.b16 %v551
        %v591 = vunpack.c.l.b16 %v552
        %v592 = vunpack.c.l.b16 %v553
        %v593 = vunpack.c.l.b16 %v554
        %v594 = vunpack.c.l.b16 %v555
        %v595 = vunpack.c.l.b16 %v556
        %v596 = vunpack.c.l.b16 %v557
        %v597 = vunpack.c.l.b16 %v558
        %v598 = vunpack.c.l.b16 %v559
        %v599 = vpack.c.b16 %v584, %v583
        %v600 = vpack.c.b16 %v586, %v585
        %v601 = vpack.c.b16 %v588, %v587
        %v602 = vpack.c.b16 %v590, %v589
        %v603 = vpack.c.b16 %v592, %v591
        %v604 = vpack.c.b16 %v594, %v593
        %v605 = vpack.c.b16 %v596, %v595
        %v606 = vpack.c.b16 %v598, %v597
        %615 = vmatprep.subr.bf16.mxu0 0
        %616 = vmatpush1.bf16.msra.mxu0 %v599
        %617 = vmatprep.subr.bf16.mxu0 0
        %618 = vmatpush1.bf16.msra.mxu0 %v600
        %619 = vmatprep.subr.bf16.mxu0 0
        %620 = vmatpush1.bf16.msra.mxu0 %v601
        %621 = vmatprep.subr.bf16.mxu0 0
        %622 = vmatpush1.bf16.msra.mxu0 %v602
        %623 = vmatprep.subr.bf16.mxu0 0
        %624 = vmatpush1.bf16.msra.mxu0 %v603
        %625 = vmatprep.subr.bf16.mxu0 0
        %626 = vmatpush1.bf16.msra.mxu0 %v604
        %627 = vmatprep.subr.bf16.mxu0 0
        %628 = vmatpush1.bf16.msra.mxu0 %v605
        %629 = vmatprep.subr.bf16.mxu0 0
        %630 = vmatpush1.bf16.msra.mxu0 %v606
        %631 = vmatprep.subr.bf16.mxu0 0
        %632 = vmatpush1.bf16.msra.mxu0 0
        %633 = vmatprep.subr.bf16.mxu0 0
        %634 = vmatpush1.bf16.msra.mxu0 0
        %635 = vmatprep.subr.bf16.mxu0 0
        %636 = vmatpush1.bf16.msra.mxu0 0
        %637 = vmatprep.subr.bf16.mxu0 0
        %638 = vmatpush1.bf16.msra.mxu0 0
        %639 = vmatprep.subr.bf16.mxu0 0
        %640 = vmatpush1.bf16.msra.mxu0 0
        %641 = vmatprep.subr.bf16.mxu0 0
        %642 = vmatpush1.bf16.msra.mxu0 0
        %643 = vmatprep.subr.bf16.mxu0 0
        %644 = vmatpush1.bf16.msra.mxu0 0
        %645 = vmatprep.subr.bf16.mxu0 0
        %646 = vmatpush1.bf16.msra.mxu0 0
        %647 = vmatprep.mubr.bf16.mxu0 0
        %648 = vmatmul.mubr.bf16.gmra.mrb[0].mxu0 %v542
        %v649 = vpop.f32.mrb[0].mxu0
        %v650 = vadd.f32 %v565, %v649
        %v651 = vpop.f32.mrb[0].mxu0
        %v652 = vpop.f32.mrb[0].mxu0
        %v653 = vadd.f32 %v565, %v652
        %v654 = vpop.f32.mrb[0].mxu0
        %655 = vmatprep.mubr.bf16.mxu0 0
        %656 = vmatmul.mubr.bf16.gmra.mrb[0].mxu0 %v543
        %v657 = vpop.f32.mrb[0].mxu0
        %v658 = vadd.f32 %v565, %v657
        %v659 = vpop.f32.mrb[0].mxu0
        %v660 = vpop.f32.mrb[0].mxu0
        %v661 = vadd.f32 %v565, %v660
        %v662 = vpop.f32.mrb[0].mxu0
        %663 = vdwg.mxu0
        %v664 = vpack.c.bf16 %v653, %v650
        %v665 = vpack.c.bf16 %v661, %v658
        %667 = vrot.lane.b32.xlu0 %v664, 96
        %v668 = vpop.permute.xlu0 %667
        %vm669 = vcmask 261120
        %v671 = vsel %vm669, %v664, 0
        %v674 = vsel %vm669, %v668, 0
        %676 = vmatprep.subr.bf16.mxu0 0
        %677 = vmatpush1.bf16.xpose.msra.mxu0 %v674
        %678 = vmatprep.subr.bf16.mxu0 0
        %679 = vmatpush1.bf16.xpose.msra.mxu0 0
        %680 = vmatprep.subr.bf16.mxu0 0
        %681 = vmatpush1.bf16.xpose.msra.mxu0 0
        %682 = vmatprep.subr.bf16.mxu0 0
        %683 = vmatpush1.bf16.xpose.msra.mxu0 0
        %684 = vmatprep.subr.bf16.mxu0 0
        %685 = vmatpush1.bf16.xpose.msra.mxu0 0
        %686 = vmatprep.subr.bf16.mxu0 0
        %687 = vmatpush1.bf16.xpose.msra.mxu0 0
        %688 = vmatprep.subr.bf16.mxu0 0
        %689 = vmatpush1.bf16.xpose.msra.mxu0 0
        %690 = vmatprep.subr.bf16.mxu0 0
        %691 = vmatpush1.bf16.xpose.msra.mxu0 0
        %692 = vmatprep.subr.bf16.mxu0 0
        %693 = vmatpush1.bf16.xpose.msra.mxu0 0
        %694 = vmatprep.subr.bf16.mxu0 0
        %695 = vmatpush1.bf16.xpose.msra.mxu0 0
        %696 = vmatprep.subr.bf16.mxu0 0
        %697 = vmatpush1.bf16.xpose.msra.mxu0 0
        %698 = vmatprep.subr.bf16.mxu0 0
        %699 = vmatpush1.bf16.xpose.msra.mxu0 0
        %700 = vmatprep.subr.bf16.mxu0 0
        %701 = vmatpush1.bf16.xpose.msra.mxu0 0
        %702 = vmatprep.subr.bf16.mxu0 0
        %703 = vmatpush1.bf16.xpose.msra.mxu0 0
        %704 = vmatprep.subr.bf16.mxu0 0
        %705 = vmatpush1.bf16.xpose.msra.mxu0 0
        %706 = vmatprep.subr.bf16.mxu0 0
        %707 = vmatpush1.bf16.xpose.msra.mxu0 0
        %708 = vmatprep.mubr.bf16.mxu0 0
        %709 = vmatmul.mubr.bf16.gmra.mrb[0].mxu0 %v671
        %v710 = vpop.f32.mrb[0].mxu0
        %v711 = vadd.f32 0.0, %v710
        %v712 = vpop.f32.mrb[0].mxu0
        %v713 = vpop.f32.mrb[0].mxu0
        %v714 = vadd.f32 0.0, %v713
        %v715 = vpop.f32.mrb[0].mxu0
        %716 = vdwg.mxu0
        %718 = vrot.lane.b32.xlu0 %v665, 96
        %v719 = vpop.permute.xlu0 %718
        %v721 = vsel %vm669, %v665, 0
        %v724 = vsel %vm669, %v719, 0
        %726 = vmatprep.subr.bf16.mxu0 0
        %727 = vmatpush1.bf16.xpose.msra.mxu0 %v724
        %728 = vmatprep.subr.bf16.mxu0 0
        %729 = vmatpush1.bf16.xpose.msra.mxu0 0
        %730 = vmatprep.subr.bf16.mxu0 0
        %731 = vmatpush1.bf16.xpose.msra.mxu0 0
        %732 = vmatprep.subr.bf16.mxu0 0
        %733 = vmatpush1.bf16.xpose.msra.mxu0 0
        %734 = vmatprep.subr.bf16.mxu0 0
        %735 = vmatpush1.bf16.xpose.msra.mxu0 0
        %736 = vmatprep.subr.bf16.mxu0 0
        %737 = vmatpush1.bf16.xpose.msra.mxu0 0
        %738 = vmatprep.subr.bf16.mxu0 0
        %739 = vmatpush1.bf16.xpose.msra.mxu0 0
        %740 = vmatprep.subr.bf16.mxu0 0
        %741 = vmatpush1.bf16.xpose.msra.mxu0 0
        %742 = vmatprep.subr.bf16.mxu0 0
        %743 = vmatpush1.bf16.xpose.msra.mxu0 0
        %744 = vmatprep.subr.bf16.mxu0 0
        %745 = vmatpush1.bf16.xpose.msra.mxu0 0
        %746 = vmatprep.subr.bf16.mxu0 0
        %747 = vmatpush1.bf16.xpose.msra.mxu0 0
        %748 = vmatprep.subr.bf16.mxu0 0
        %749 = vmatpush1.bf16.xpose.msra.mxu0 0
        %750 = vmatprep.subr.bf16.mxu0 0
        %751 = vmatpush1.bf16.xpose.msra.mxu0 0
        %752 = vmatprep.subr.bf16.mxu0 0
        %753 = vmatpush1.bf16.xpose.msra.mxu0 0
        %754 = vmatprep.subr.bf16.mxu0 0
        %755 = vmatpush1.bf16.xpose.msra.mxu0 0
        %756 = vmatprep.subr.bf16.mxu0 0
        %757 = vmatpush1.bf16.xpose.msra.mxu0 0
        %758 = vmatprep.mubr.bf16.mxu0 0
        %759 = vmatmul.mubr.bf16.gmra.mrb[0].mxu0 %v721
        %v760 = vpop.f32.mrb[0].mxu0
        %v761 = vadd.f32 0.0, %v760
        %v762 = vpop.f32.mrb[0].mxu0
        %v763 = vpop.f32.mrb[0].mxu0
        %v764 = vadd.f32 0.0, %v763
        %v765 = vpop.f32.mrb[0].mxu0
        %766 = vdwg.mxu0
        %vm767 = vcmask 130048
        %v768 = vsel %vm767, %v711, -inf
        %769 = vmax.xlane.f32.xlu0 %v768
        %v770 = vpop.xlane.xlu0 %769
        %v771 = vsel %vm767, %v714, -inf
        %772 = vmax.xlane.f32.xlu0 %v771
        %v773 = vpop.xlane.xlu0 %772
        %v774 = vsel %vm767, %v761, -inf
        %775 = vmax.xlane.f32.xlu0 %v774
        %v776 = vpop.xlane.xlu0 %775
        %v777 = vsel %vm767, %v764, -inf
        %778 = vmax.xlane.f32.xlu0 %v777
        %v779 = vpop.xlane.xlu0 %778
        %v780 = vsub.f32 %v711, %v770
        %v781 = vsub.f32 %v714, %v773
        %v782 = vsub.f32 %v761, %v776
        %v783 = vsub.f32 %v764, %v779
        %v784 = vmul.f32 %v780, 1.442695
        %v785 = vpow.pop %v784
        %v786 = vmul.f32 %v781, 1.442695
        %v787 = vpow.pop %v786
        %v788 = vmul.f32 %v782, 1.442695
        %v789 = vpow.pop %v788
        %v790 = vmul.f32 %v783, 1.442695
        %v791 = vpow.pop %v790
        %v792 = vsel %vm767, %v785, 0.0
        %793 = vadd.xlane.f32.xlu0 %v792
        %v794 = vpop.xlane.xlu0 %793
        %v795 = vsel %vm767, %v787, 0.0
        %796 = vadd.xlane.f32.xlu0 %v795
        %v797 = vpop.xlane.xlu0 %796
        %v798 = vsel %vm767, %v789, 0.0
        %799 = vadd.xlane.f32.xlu0 %v798
        %v800 = vpop.xlane.xlu0 %799
        %v801 = vsel %vm767, %v791, 0.0
        %802 = vadd.xlane.f32.xlu0 %v801
        %v803 = vpop.xlane.xlu0 %802
        %v804 = vrcp.pop %v794
        %v805 = vmul.f32 %v785, %v804
        %v806 = vrcp.pop %v797
        %v807 = vmul.f32 %v787, %v806
        %v808 = vrcp.pop %v800
        %v809 = vmul.f32 %v789, %v808
        %v810 = vrcp.pop %v803
        %v811 = vmul.f32 %v791, %v810
        %v812 = vpack.c.bf16 %v807, %v805
        %v813 = vpack.c.bf16 %v811, %v809
        %814 = vrot.lane.b32.xlu0 %v664, 64
        %v815 = vpop.permute.xlu0 %814
        %v818 = vsel %vm767, %v812, 0
        %820 = vmatprep.subr.bf16.mxu0 0
        %821 = vmatpush1.bf16.msra.mxu0 %v815
        %822 = vmatprep.subr.bf16.mxu0 0
        %823 = vmatpush1.bf16.msra.mxu0 0
        %824 = vmatprep.subr.bf16.mxu0 0
        %825 = vmatpush1.bf16.msra.mxu0 0
        %826 = vmatprep.subr.bf16.mxu0 0
        %827 = vmatpush1.bf16.msra.mxu0 0
        %828 = vmatprep.subr.bf16.mxu0 0
        %829 = vmatpush1.bf16.msra.mxu0 0
        %830 = vmatprep.subr.bf16.mxu0 0
        %831 = vmatpush1.bf16.msra.mxu0 0
        %832 = vmatprep.subr.bf16.mxu0 0
        %833 = vmatpush1.bf16.msra.mxu0 0
        %834 = vmatprep.subr.bf16.mxu0 0
        %835 = vmatpush1.bf16.msra.mxu0 0
        %836 = vmatprep.subr.bf16.mxu0 0
        %837 = vmatpush1.bf16.msra.mxu0 0
        %838 = vmatprep.subr.bf16.mxu0 0
        %839 = vmatpush1.bf16.msra.mxu0 0
        %840 = vmatprep.subr.bf16.mxu0 0
        %841 = vmatpush1.bf16.msra.mxu0 0
        %842 = vmatprep.subr.bf16.mxu0 0
        %843 = vmatpush1.bf16.msra.mxu0 0
        %844 = vmatprep.subr.bf16.mxu0 0
        %845 = vmatpush1.bf16.msra.mxu0 0
        %846 = vmatprep.subr.bf16.mxu0 0
        %847 = vmatpush1.bf16.msra.mxu0 0
        %848 = vmatprep.subr.bf16.mxu0 0
        %849 = vmatpush1.bf16.msra.mxu0 0
        %850 = vmatprep.subr.bf16.mxu0 0
        %851 = vmatpush1.bf16.msra.mxu0 0
        %852 = vmatprep.mubr.bf16.mxu0 0
        %853 = vmatmul.mubr.bf16.gmra.mrb[0].mxu0 %v818
        %v854 = vpop.f32.mrb[0].mxu0
        %v855 = vadd.f32 0.0, %v854
        %v856 = vpop.f32.mrb[0].mxu0
        %v857 = vpop.f32.mrb[0].mxu0
        %v858 = vadd.f32 0.0, %v857
        %v859 = vpop.f32.mrb[0].mxu0
        %860 = vdwg.mxu0
        %861 = vrot.lane.b32.xlu0 %v665, 64
        %v862 = vpop.permute.xlu0 %861
        %v865 = vsel %vm767, %v813, 0
        %867 = vmatprep.subr.bf16.mxu0 0
        %868 = vmatpush1.bf16.msra.mxu0 %v862
        %869 = vmatprep.subr.bf16.mxu0 0
        %870 = vmatpush1.bf16.msra.mxu0 0
        %871 = vmatprep.subr.bf16.mxu0 0
        %872 = vmatpush1.bf16.msra.mxu0 0
        %873 = vmatprep.subr.bf16.mxu0 0
        %874 = vmatpush1.bf16.msra.mxu0 0
        %875 = vmatprep.subr.bf16.mxu0 0
        %876 = vmatpush1.bf16.msra.mxu0 0
        %877 = vmatprep.subr.bf16.mxu0 0
        %878 = vmatpush1.bf16.msra.mxu0 0
        %879 = vmatprep.subr.bf16.mxu0 0
        %880 = vmatpush1.bf16.msra.mxu0 0
        %881 = vmatprep.subr.bf16.mxu0 0
        %882 = vmatpush1.bf16.msra.mxu0 0
        %883 = vmatprep.subr.bf16.mxu0 0
        %884 = vmatpush1.bf16.msra.mxu0 0
        %885 = vmatprep.subr.bf16.mxu0 0
        %886 = vmatpush1.bf16.msra.mxu0 0
        %887 = vmatprep.subr.bf16.mxu0 0
        %888 = vmatpush1.bf16.msra.mxu0 0
        %889 = vmatprep.subr.bf16.mxu0 0
        %890 = vmatpush1.bf16.msra.mxu0 0
        %891 = vmatprep.subr.bf16.mxu0 0
        %892 = vmatpush1.bf16.msra.mxu0 0
        %893 = vmatprep.subr.bf16.mxu0 0
        %894 = vmatpush1.bf16.msra.mxu0 0
        %895 = vmatprep.subr.bf16.mxu0 0
        %896 = vmatpush1.bf16.msra.mxu0 0
        %897 = vmatprep.subr.bf16.mxu0 0
        %898 = vmatpush1.bf16.msra.mxu0 0
        %899 = vmatprep.mubr.bf16.mxu0 0
        %900 = vmatmul.mubr.bf16.gmra.mrb[0].mxu0 %v865
        %v901 = vpop.f32.mrb[0].mxu0
        %v902 = vadd.f32 0.0, %v901
        %v903 = vpop.f32.mrb[0].mxu0
        %v904 = vpop.f32.mrb[0].mxu0
        %v905 = vadd.f32 0.0, %v904
        %v906 = vpop.f32.mrb[0].mxu0
        %907 = vdwg.mxu0
        %v908 = vpack.c.bf16 %v858, %v855
        %v909 = vpack.c.bf16 %v905, %v902
        %v910 = vld [vmem:[%s380] sm:$0xf]
        %v911 = vld [vmem:[%s380 + $0x4] sm:$0xf]
        %v912 = vld [vmem:[%s380 + $0x8] sm:$0xf]
        %v913 = vld [vmem:[%s380 + $0xc] sm:$0xf]
        %v914 = vld [vmem:[%s384] sm:$0x1]
        %v915 = vlaneseq
        %v916 = vshrl.u32 %v915, 7
        %v917 = vsub.s32 0, %v916
        %v918 = vrot.slane %v914, %v917
        %v923 = vunpack.c.l.b16 %v910
        %v924 = vunpack.c.l.b16 %v911
        %v925 = vunpack.c.l.b16 %v912
        %v926 = vunpack.c.l.b16 %v913
        %v927 = vpack.c.b16 %v924, %v923
        %v928 = vpack.c.b16 %v926, %v925
        %v932 = vsel %vm669, %v908, 0
        %v935 = vsel %vm669, %v909, 0
        %937 = vmatprep.subr.bf16.mxu0 0
        %938 = vmatpush1.bf16.msra.mxu0 %v927
        %939 = vmatprep.subr.bf16.mxu0 0
        %940 = vmatpush1.bf16.msra.mxu0 %v928
        %941 = vmatprep.subr.bf16.mxu0 0
        %942 = vmatpush1.bf16.msra.mxu0 0
        %943 = vmatprep.subr.bf16.mxu0 0
        %944 = vmatpush1.bf16.msra.mxu0 0
        %945 = vmatprep.subr.bf16.mxu0 0
        %946 = vmatpush1.bf16.msra.mxu0 0
        %947 = vmatprep.subr.bf16.mxu0 0
        %948 = vmatpush1.bf16.msra.mxu0 0
        %949 = vmatprep.subr.bf16.mxu0 0
        %950 = vmatpush1.bf16.msra.mxu0 0
        %951 = vmatprep.subr.bf16.mxu0 0
        %952 = vmatpush1.bf16.msra.mxu0 0
        %953 = vmatprep.subr.bf16.mxu0 0
        %954 = vmatpush1.bf16.msra.mxu0 0
        %955 = vmatprep.subr.bf16.mxu0 0
        %956 = vmatpush1.bf16.msra.mxu0 0
        %957 = vmatprep.subr.bf16.mxu0 0
        %958 = vmatpush1.bf16.msra.mxu0 0
        %959 = vmatprep.subr.bf16.mxu0 0
        %960 = vmatpush1.bf16.msra.mxu0 0
        %961 = vmatprep.subr.bf16.mxu0 0
        %962 = vmatpush1.bf16.msra.mxu0 0
        %963 = vmatprep.subr.bf16.mxu0 0
        %964 = vmatpush1.bf16.msra.mxu0 0
        %965 = vmatprep.subr.bf16.mxu0 0
        %966 = vmatpush1.bf16.msra.mxu0 0
        %967 = vmatprep.subr.bf16.mxu0 0
        %968 = vmatpush1.bf16.msra.mxu0 0
        %969 = vmatprep.mubr.bf16.mxu0 0
        %970 = vmatmul.mubr.bf16.gmra.mrb[0].mxu0 %v932
        %v971 = vpop.f32.mrb[0].mxu0
        %v972 = vadd.f32 %v918, %v971
        %v973 = vpop.f32.mrb[0].mxu0
        %v974 = vpop.f32.mrb[0].mxu0
        %v975 = vadd.f32 %v918, %v974
        %v976 = vpop.f32.mrb[0].mxu0
        %977 = vmatprep.mubr.bf16.mxu0 0
        %978 = vmatmul.mubr.bf16.gmra.mrb[0].mxu0 %v935
        %v979 = vpop.f32.mrb[0].mxu0
        %v980 = vadd.f32 %v918, %v979
        %v981 = vpop.f32.mrb[0].mxu0
        %v982 = vpop.f32.mrb[0].mxu0
        %v983 = vadd.f32 %v918, %v982
        %v984 = vpop.f32.mrb[0].mxu0
        %985 = vdwg.mxu0
        %v986 = vadd.f32 %v972, %v538
        %v987 = vadd.f32 %v975, %v539
        %v988 = vadd.f32 %v980, %v540
        %v989 = vadd.f32 %v983, %v541
        %v990 = vld [vmem:[%s384 + $0x1] sm:$0x1]
        %v991 = vld [vmem:[%s384 + $0x2] sm:$0x1]
        %992 = vadd.xlane.f32.xlu0 %v986
        %v993 = vpop.xlane.xlu0 %992
        %994 = vadd.xlane.f32.xlu0 %v987
        %v995 = vpop.xlane.xlu0 %994
        %996 = vadd.xlane.f32.xlu0 %v988
        %v997 = vpop.xlane.xlu0 %996
        %998 = vadd.xlane.f32.xlu0 %v989
        %v999 = vpop.xlane.xlu0 %998
        %v1000 = vrcp.pop 128.0
        %v1001 = vmul.f32 %v993, %v1000
        %v1002 = vmul.f32 %v995, %v1000
        %v1003 = vmul.f32 %v997, %v1000
        %v1004 = vmul.f32 %v999, %v1000
        %v1005 = vsub.f32 %v986, %v1001
        %v1006 = vsub.f32 %v987, %v1002
        %v1007 = vsub.f32 %v988, %v1003
        %v1008 = vsub.f32 %v989, %v1004
        %v1009 = vmul.f32 %v1005, %v1005
        %v1010 = vmul.f32 %v1006, %v1006
        %v1011 = vmul.f32 %v1007, %v1007
        %v1012 = vmul.f32 %v1008, %v1008
        %1013 = vadd.xlane.f32.xlu0 %v1009
        %v1014 = vpop.xlane.xlu0 %1013
        %1015 = vadd.xlane.f32.xlu0 %v1010
        %v1016 = vpop.xlane.xlu0 %1015
        %1017 = vadd.xlane.f32.xlu0 %v1011
        %v1018 = vpop.xlane.xlu0 %1017
        %1019 = vadd.xlane.f32.xlu0 %v1012
        %v1020 = vpop.xlane.xlu0 %1019
        %v1021 = vmul.f32 %v1014, %v1000
        %v1022 = vmul.f32 %v1016, %v1000
        %v1023 = vmul.f32 %v1018, %v1000
        %v1024 = vmul.f32 %v1020, %v1000
        %v1025 = vadd.f32 %v1021, 1e-05
        %v1026 = vadd.f32 %v1022, 1e-05
        %v1027 = vadd.f32 %v1023, 1e-05
        %v1028 = vadd.f32 %v1024, 1e-05
        %v1029 = vrsqrt.pop %v1025
        %v1030 = vrsqrt.pop %v1026
        %v1031 = vrsqrt.pop %v1027
        %v1032 = vrsqrt.pop %v1028
        %v1033 = vmul.f32 %v1005, %v1029
        %v1034 = vmul.f32 %v1006, %v1030
        %v1035 = vmul.f32 %v1007, %v1031
        %v1036 = vmul.f32 %v1008, %v1032
        %v1037 = vlaneseq
        %v1038 = vshrl.u32 %v1037, 7
        %v1039 = vsub.s32 0, %v1038
        %v1040 = vrot.slane %v990, %v1039
        %v1041 = vmul.f32 %v1033, %v1040
        %v1042 = vmul.f32 %v1034, %v1040
        %v1043 = vmul.f32 %v1035, %v1040
        %v1044 = vmul.f32 %v1036, %v1040
        %v1045 = vlaneseq
        %v1046 = vshrl.u32 %v1045, 7
        %v1047 = vsub.s32 0, %v1046
        %v1048 = vrot.slane %v991, %v1047
        %v1049 = vadd.f32 %v1041, %v1048
        %v1050 = vadd.f32 %v1042, %v1048
        %v1051 = vadd.f32 %v1043, %v1048
        %v1052 = vadd.f32 %v1044, %v1048
        %1053 = vst [vmem:[%s365] sm:$0xff] %v1049
        %1054 = vst [vmem:[%s365 + $0x8] sm:$0xff] %v1050
        %1055 = vst [vmem:[%s365 + $0x10] sm:$0xff] %v1051
        %1056 = vst [vmem:[%s365 + $0x18] sm:$0xff] %v1052
        %s1057 = sand.u32 %s216, 1
        %s1058 = scalar_lea.sflag [#allocation4], %s1057
        %s1059 = sand.u32 %s216, 1
        %s1060 = smul.addr %s1059, 32
        %s1061 = scalar_lea.vmem [#allocation5], %s1060
        // Predicated region
        $region57: #{tpu_custom_call.1} parent=47 // pred_check
          %p1062 = pneg %p226
        $region58: #{tpu_custom_call.1} parent=47 // pred_check_branch
          %1064 = sbr.rel (%p1062) target = $region60
        $region59: #{tpu_custom_call.1} parent=47 // pred_region
          %s1065 = smul.u32 2, %s28
          %s1067 = ssub.s32 512, 512
          %1068 = vsyncadd %s1058, %s1067
          %s1069 = smul.addr %s1065, 2
          %s1070 = smul.addr %s1069, 128
          %s1071 = scalar_lea.hbm %s7, %s1070
          %s1072 = sshll.u32 %s1061, 4
          %s1073 = int_to_ptr.vmem [resolvable:$true] %s1072
          %1078 = dma.vmem_to_hbm [thread:$0]  %s1073, 512, %s1071, %s1058, 128, 128, 8
        $region60: #{tpu_custom_call.1} parent=47 // pred_fallthru
          _
      $region48: #{tpu_custom_call.1} parent=5 // pred_fallthru
        _
      %p1079 = scmp.le.s32.totalorder 2, %s19
      // Predicated region
      $region61: #{tpu_custom_call.1} parent=5 // pred_check
        %p1080 = pneg %p1079
      $region62: #{tpu_custom_call.1} parent=5 // pred_check_branch
        %1082 = sbr.rel (%p1080) target = $region64
      $region63: #{tpu_custom_call.1} parent=5 // pred_region
        %s1083 = ssub.s32 %s19, 2
        // Predicated region
        $region65: #{tpu_custom_call.1} parent=63 // pred_check
          %p1084 = pneg %p232
        $region66: #{tpu_custom_call.1} parent=63 // pred_check_branch
          %1086 = sbr.rel (%p1084) target = $region68
        $region67: #{tpu_custom_call.1} parent=63 // pred_region
          %s1087 = sand.u32 %s217, 1
          %s1088 = scalar_lea.sflag [#allocation4], %s1087
          %s1089 = sand.u32 %s217, 1
          %s1090 = smul.addr %s1089, 32
          %s1091 = scalar_lea.vmem [#allocation5], %s1090
          %1092 = dma.done %s1088, 512
        $region68: #{tpu_custom_call.1} parent=63 // pred_fallthru
          _
      $region64: #{tpu_custom_call.1} parent=5 // pred_fallthru
        _
    $region6: #{tpu_custom_call.1} parent=1 // loop_footer
      %s23 = sadd.s32 1, %s19
    $region7: #{tpu_custom_call.1} parent=1 // loop_footer_branch
      %18 = sbr.rel target = $region3
    $region8: #{tpu_custom_call.1} parent=1 // loop_exit
      _
    %1093 = vsyncpa [#allocation3], 1
    %s1094 = scalar_lea.sflag [#allocation3], 1
    %1095 = vsyncpa %s1094, 1
    %1096 = vsyncpa [#allocation4], 1
    %s1097 = scalar_lea.sflag [#allocation4], 1
    %1098 = vsyncpa %s1097, 1

</llo_original>
